<compile_context>
chip_gen: v6e
topology: v6e:2x2x1
jax: 0.10.0
libtpu: 0.0.40
codegen_flags: <defaults>
</compile_context>

<pallas_src>
import numpy as np
import jax
import jax.numpy as jnp
from jax import lax
from jax.experimental import pallas as pl
from jax.experimental.pallas import tpu as pltpu


# ---------------- parameter initialisation (deterministic, synthetic) ----------------

def _random_orthonormal(rng, n, m=None):
    m = n if m is None else m
    assert m >= n
    x = rng.standard_normal((m, m))
    Q, r = np.linalg.qr(x, mode="reduced")
    flipper = np.diag(np.sign(np.diag(r)))
    square_orthog = Q.dot(flipper)
    return square_orthog[:n, :]


def orthonormal_matrix(rng, nrow, ncol):
    nrep = nrow // ncol
    out = np.zeros((nrow, ncol), dtype="f4")
    for i in range(nrep):
        out[i * ncol:i * ncol + ncol] = _random_orthonormal(rng, ncol)
    remsize = nrow - nrep * ncol
    if remsize > 0:
        out[nrep * ncol:, :] = _random_orthonormal(rng, remsize, ncol)
    return out


def truncated_normal(key, size, sd):
    return (sd * jax.random.truncated_normal(key, -2.0, 2.0, shape=(size,))).astype(jnp.float32)


# ---------------- Pallas kernel ----------------

def softmax_layer_kernel(x_ref, w_ref, b_ref, o_ref):
    # x_ref: (tm, Kp) activation dtype; w_ref: (Np, Kp) bf16 (PyTorch layout,
    # contracted on K -> no host-side W.T); b_ref: (1, Np) f32; o_ref: (tm, Np).
    xa = x_ref[...].astype(jnp.bfloat16)                # bf16 feeds the MXU at full rate
    z = lax.dot_general(
        xa, w_ref[...],
        dimension_numbers=(((1,), (1,)), ((), ())),
        preferred_element_type=jnp.float32,             # f32 accumulation
    )                                                   # (tm, Np) f32
    z = z + b_ref[...]                                  # f32 bias (padded cols = -1e30)
    m = jnp.max(z, axis=-1, keepdims=True)              # stable log-softmax, f32 math
    e = z - m
    lse = jnp.log(jnp.sum(jnp.exp(e), axis=-1, keepdims=True))
    o_ref[...] = (e - lse).astype(o_ref.dtype)


def _round_up(x, m):
    return ((x + m - 1) // m) * m


def _lane_pad(dim):
    # 256-multiples for large feature dims (v6e/v7x 256x256 MXU), 128 otherwise
    # (v5e MXU is 128-wide and small dims would only pay extra padding).
    return _round_up(dim, 256) if dim >= 1024 else _round_up(dim, 128)


def _vmem_capacity_bytes():
    try:
        return int(pltpu.get_tpu_info().vmem_capacity_bytes)
    except Exception:
        return 64 * 1024 * 1024   # conservative default (v7x per-TensorCore)


def softmax_layer(x, W, b, *, tm=1024):
    """x: (T, B, insize); W: (size, insize) [PyTorch layout]; b: (size,)."""
    T, B, insize = x.shape
    size = W.shape[0]
    M = T * B

    K_pad = _lane_pad(insize)
    N_pad = _lane_pad(size)

    x_itemsize = jnp.dtype(x.dtype).itemsize
    out_itemsize = x_itemsize

    # Generation-aware VMEM budget (~48 MiB on v7x, ~96 MiB on v5e/v6e).
    vmem_cap = _vmem_capacity_bytes()
    vmem_limit = (vmem_cap * 3) // 4

    # Row-tile budget: double-buffered x/out tiles + f32 intermediates per row,
    # plus the (conservatively double-buffered) resident bf16 weight + bias.
    per_row = 2 * K_pad * x_itemsize + 2 * N_pad * out_itemsize + 3 * N_pad * 4
    fixed = 2 * (N_pad * K_pad * 2 + N_pad * 4)
    tm_budget = max(8, (((vmem_limit * 4) // 5 - fixed) // per_row) // 8 * 8)
    # NOTE: if the resident weight alone ever exceeded the budget (insize*size in
    # the many millions), a K grid axis ("arbitrary") with an f32 VMEM accumulator
    # would be needed; taiyaki-scale layers never approach that.

    # Large tile for throughput, but at least 2 grid steps when M > 8 so the
    # "parallel" axis can shard across v7x's two TensorCores.
    tm_eff = max(8, min(tm, tm_budget, _round_up(pl.cdiv(M, 2), 8)))

    # Activations: flatten time/batch; pad only the contraction dim (if needed).
    x2 = x.reshape(M, insize)
    if K_pad != insize:
        x2 = jnp.pad(x2, ((0, 0), (0, K_pad - insize)))
    # No row padding: cdiv grid + ragged last block handled by Pallas.

    # Weight stays in PyTorch layout (size, insize); zero-pad then cast to bf16.
    W_pad = W
    if (N_pad, K_pad) != W.shape:
        W_pad = jnp.pad(W, ((0, N_pad - size), (0, K_pad - insize)))
    W_pad = W_pad.astype(jnp.bfloat16)

    # Padded output columns get a huge negative f32 bias so they never affect
    # the max / log-sum-exp (safe because logits stay f32 inside the kernel).
    b_pad = jnp.full((1, N_pad), -1e30, dtype=jnp.float32)
    b_pad = b_pad.at[0, :size].set(b.astype(jnp.float32))

    grid = (pl.cdiv(M, tm_eff),)
    cost = pl.CostEstimate(
        flops=2 * M * K_pad * N_pad,
        transcendentals=M * N_pad,
        bytes_accessed=(M * K_pad * x_itemsize + N_pad * K_pad * 2
                        + N_pad * 4 + M * N_pad * out_itemsize),
    )

    def build_call(single_buffer_params):
        # Weight/bias are grid-invariant; single-buffering halves their resident
        # VMEM (matters most on v7x's 64 MiB / TensorCore).
        wb_kwargs = dict(pipeline_mode=pl.Buffered(1)) if single_buffer_params else {}
        return pl.pallas_call(
            softmax_layer_kernel,
            out_shape=jax.ShapeDtypeStruct((M, N_pad), x.dtype),
            grid_spec=pltpu.PrefetchScalarGridSpec(
                num_scalar_prefetch=0,
                grid=grid,
                in_specs=[
                    pl.BlockSpec((tm_eff, K_pad), lambda i: (i, 0)),              # activations: tiled rows
                    pl.BlockSpec((N_pad, K_pad), lambda i: (0, 0), **wb_kwargs),  # weight: VMEM-resident
                    pl.BlockSpec((1, N_pad), lambda i: (0, 0), **wb_kwargs),      # bias: VMEM-resident
                ],
                out_specs=pl.BlockSpec((tm_eff, N_pad), lambda i: (i, 0)),
            ),
            compiler_params=pltpu.CompilerParams(
                dimension_semantics=("parallel",),      # shards rows across TCs on v7x
                vmem_limit_bytes=int(vmem_limit),
            ),
            cost_estimate=cost,
        )

    try:
        out2 = build_call(True)(x2, W_pad, b_pad)
    except Exception:
        # Some JAX versions reject Buffered(1) on pallas_call BlockSpecs; the
        # default double-buffering is still correct (just uses a bit more VMEM).
        out2 = build_call(False)(x2, W_pad, b_pad)

    # Only padded feature columns need slicing away (no row pad was added).
    if N_pad != size:
        out2 = out2[:, :size]
    return out2.reshape(T, B, size)


# ---------------- references (plain JAX) ----------------

def softmax_layer_ref(x, W, b):
    z = jnp.einsum("tbi,oi->tbo", x, W) + b
    return jax.nn.log_softmax(z, axis=-1)


def softmax_layer_ref_bf16(x, W, b):
    # Mirrors the kernel numerics: bf16 matmul operands, f32 accumulation,
    # f32 bias + log-softmax.
    z = jnp.einsum("tbi,oi->tbo", x.astype(jnp.bfloat16), W.astype(jnp.bfloat16),
                   preferred_element_type=jnp.float32)
    z = z + b.astype(jnp.float32)
    return jax.nn.log_softmax(z, axis=-1)


if __name__ == "__main__":
    # small shapes consistent with the module: seq T=8, batch B=2, insize=32, size=16
    T, B, insize, size = 8, 2, 32, 16

    key = jax.random.PRNGKey(0)
    kx, kb = jax.random.split(key)

    x = jax.random.normal(kx, (T, B, insize), dtype=jnp.float32)

    # deterministic orthonormal weight init (as in reset_parameters)
    rng = np.random.default_rng(0)
    W = jnp.asarray(orthonormal_matrix(rng, size, insize))   # (size, insize)
    b = truncated_normal(kb, size, sd=0.5)                   # (size,)

    out = softmax_layer(x, W, b)
    out = jax.block_until_ready(out)

    # numerics check against a reference using the same bf16-matmul / f32-softmax recipe
    ref_bf16 = softmax_layer_ref_bf16(x, W, b)
    np.testing.assert_allclose(np.asarray(out), np.asarray(ref_bf16), atol=1e-4, rtol=1e-4)

    # semantic check against the full-f32 module reference (bf16 matmul rounding only)
    ref_f32 = softmax_layer_ref(x, W, b)
    np.testing.assert_allclose(np.asarray(out), np.asarray(ref_f32), atol=3e-2, rtol=3e-2)

    print("KERNEL_OK")
</pallas_src>

<mosaic_0001>
module attributes {stable_mosaic.version = 11 : i64} {
  func.func @softmax_layer_kernel(%arg0: i32, %arg1: memref<8x128xf32, #tpu.memory_space<vmem>>, %arg2: memref<128x128xbf16, #tpu.memory_space<vmem>>, %arg3: memref<1x128xf32, #tpu.memory_space<vmem>>, %arg4: memref<8x128xf32, #tpu.memory_space<vmem>>) attributes {dimension_semantics = [#tpu.dimension_semantics<parallel>], iteration_bounds = array<i64: 2>, scalar_prefetch = 0 : i64, scratch_operands = 0 : i64, tpu.core_type = #tpu.core_type<tc>, window_params = [{transform_indices = @transform_0, window_bounds = array<i64: 8, 128>}, {pipeline_mode = #tpu.pipeline_mode<synchronous>, transform_indices = @transform_1, window_bounds = array<i64: 128, 128>}, {pipeline_mode = #tpu.pipeline_mode<synchronous>, transform_indices = @transform_2, window_bounds = array<i64: 1, 128>}, {transform_indices = @transform_3, window_bounds = array<i64: 8, 128>}]} {
    %c0 = arith.constant 0 : index
    %c0_0 = arith.constant 0 : index
    %0 = vector.load %arg1[%c0, %c0_0] : memref<8x128xf32, #tpu.memory_space<vmem>>, vector<8x128xf32>
    %1 = arith.truncf %0 : vector<8x128xf32> to vector<8x128xbf16>
    %c0_1 = arith.constant 0 : index
    %c0_2 = arith.constant 0 : index
    %2 = vector.load %arg2[%c0_1, %c0_2] : memref<128x128xbf16, #tpu.memory_space<vmem>>, vector<128x128xbf16>
    %cst = arith.constant dense<0.000000e+00> : vector<8x128xf32>
    %3 = tpu.matmul %1, %2, %cst {dimension_numbers = #tpu.dot_dimension_numbers<[1], [1], [0], [0], [0, 0, 1, 0], [], []>} : vector<8x128xbf16>, vector<128x128xbf16>, vector<8x128xf32> -> vector<8x128xf32>
    %c0_3 = arith.constant 0 : index
    %c0_4 = arith.constant 0 : index
    %4 = vector.load %arg3[%c0_3, %c0_4] : memref<1x128xf32, #tpu.memory_space<vmem>>, vector<1x128xf32>
    %5 = vector.broadcast %4 : vector<1x128xf32> to vector<8x128xf32>
    %6 = arith.addf %3, %5 : vector<8x128xf32>
    %cst_5 = arith.constant dense<0xFF800000> : vector<8xf32>
    %7 = vector.multi_reduction <maximumf>, %6, %cst_5 [1] : vector<8x128xf32> to vector<8xf32>
    %8 = vector.shape_cast %7 : vector<8xf32> to vector<8x1xf32>
    %9 = vector.broadcast %8 : vector<8x1xf32> to vector<8x128xf32>
    %10 = arith.subf %6, %9 : vector<8x128xf32>
    %11 = math.exp %10 : vector<8x128xf32>
    %cst_6 = arith.constant dense<0.000000e+00> : vector<8xf32>
    %12 = vector.multi_reduction <add>, %11, %cst_6 [1] : vector<8x128xf32> to vector<8xf32>
    %13 = vector.shape_cast %12 : vector<8xf32> to vector<8x1xf32>
    %14 = math.log %13 : vector<8x1xf32>
    %15 = vector.broadcast %14 : vector<8x1xf32> to vector<8x128xf32>
    %16 = arith.subf %10, %15 : vector<8x128xf32>
    %c0_7 = arith.constant 0 : index
    %c0_8 = arith.constant 0 : index
    %17 = vector.load %arg4[%c0_7, %c0_8] : memref<8x128xf32, #tpu.memory_space<vmem>>, vector<8x128xf32>
    tpu.vector_store %arg4[%c0_7, %c0_8], %16 {strides = array<i32>} : memref<8x128xf32, #tpu.memory_space<vmem>>, vector<8x128xf32>,
    return
  }
  func.func @transform_0(%arg0: i32) -> (i32, i32) {
    %c0_i32 = arith.constant 0 : i32
    %c0_i32_0 = arith.constant 0 : i32
    return %arg0, %c0_i32 : i32, i32
  }
  func.func @transform_1(%arg0: i32) -> (i32, i32) {
    %c0_i32 = arith.constant 0 : i32
    %c0_i32_0 = arith.constant 0 : i32
    %c0_i32_1 = arith.constant 0 : i32
    return %c0_i32, %c0_i32_0 : i32, i32
  }
  func.func @transform_2(%arg0: i32) -> (i32, i32) {
    %c0_i32 = arith.constant 0 : i32
    %c0_i32_0 = arith.constant 0 : i32
    %c0_i32_1 = arith.constant 0 : i32
    return %c0_i32, %c0_i32_0 : i32, i32
  }
  func.func @transform_3(%arg0: i32) -> (i32, i32) {
    %c0_i32 = arith.constant 0 : i32
    %c0_i32_0 = arith.constant 0 : i32
    return %arg0, %c0_i32 : i32, i32
  }
}

module attributes {stable_mosaic.version = 11 : i64} {
  func.func @softmax_layer_kernel(%arg0: i32, %arg1: memref<8x128xf32, #tpu.memory_space<vmem>>, %arg2: memref<128x128xbf16, #tpu.memory_space<vmem>>, %arg3: memref<1x128xf32, #tpu.memory_space<vmem>>, %arg4: memref<8x128xf32, #tpu.memory_space<vmem>>) attributes {dimension_semantics = [#tpu.dimension_semantics<parallel>], iteration_bounds = array<i64: 2>, scalar_prefetch = 0 : i64, scratch_operands = 0 : i64, tpu.core_type = #tpu.core_type<tc>, window_params = [{transform_indices = @transform_0, window_bounds = array<i64: 8, 128>}, {pipeline_mode = #tpu.pipeline_mode<synchronous>, transform_indices = @transform_1, window_bounds = array<i64: 128, 128>}, {pipeline_mode = #tpu.pipeline_mode<synchronous>, transform_indices = @transform_2, window_bounds = array<i64: 1, 128>}, {transform_indices = @transform_3, window_bounds = array<i64: 8, 128>}]} {
    %c0 = arith.constant 0 : index
    %c0_0 = arith.constant 0 : index
    %0 = vector.load %arg1[%c0, %c0_0] : memref<8x128xf32, #tpu.memory_space<vmem>>, vector<8x128xf32>
    %1 = arith.truncf %0 : vector<8x128xf32> to vector<8x128xbf16>
    %c0_1 = arith.constant 0 : index
    %c0_2 = arith.constant 0 : index
    %2 = vector.load %arg2[%c0_1, %c0_2] : memref<128x128xbf16, #tpu.memory_space<vmem>>, vector<128x128xbf16>
    %cst = arith.constant dense<0.000000e+00> : vector<8x128xf32>
    %3 = tpu.matmul %1, %2, %cst {dimension_numbers = #tpu.dot_dimension_numbers<[1], [1], [0], [0], [0, 0, 1, 0], [], []>} : vector<8x128xbf16>, vector<128x128xbf16>, vector<8x128xf32> -> vector<8x128xf32>
    %c0_3 = arith.constant 0 : index
    %c0_4 = arith.constant 0 : index
    %4 = vector.load %arg3[%c0_3, %c0_4] : memref<1x128xf32, #tpu.memory_space<vmem>>, vector<1x128xf32>
    %5 = vector.broadcast %4 : vector<1x128xf32> to vector<8x128xf32>
    %6 = arith.addf %3, %5 : vector<8x128xf32>
    %cst_5 = arith.constant dense<0xFF800000> : vector<8xf32>
    %7 = vector.multi_reduction <maximumf>, %6, %cst_5 [1] : vector<8x128xf32> to vector<8xf32>
    %8 = vector.shape_cast %7 : vector<8xf32> to vector<8x1xf32>
    %9 = vector.broadcast %8 : vector<8x1xf32> to vector<8x128xf32>
    %10 = arith.subf %6, %9 : vector<8x128xf32>
    %11 = math.exp %10 : vector<8x128xf32>
    %cst_6 = arith.constant dense<0.000000e+00> : vector<8xf32>
    %12 = vector.multi_reduction <add>, %11, %cst_6 [1] : vector<8x128xf32> to vector<8xf32>
    %13 = vector.shape_cast %12 : vector<8xf32> to vector<8x1xf32>
    %14 = math.log %13 : vector<8x1xf32>
    %15 = vector.broadcast %14 : vector<8x1xf32> to vector<8x128xf32>
    %16 = arith.subf %10, %15 : vector<8x128xf32>
    %c0_7 = arith.constant 0 : index
    %c0_8 = arith.constant 0 : index
    %17 = vector.load %arg4[%c0_7, %c0_8] : memref<8x128xf32, #tpu.memory_space<vmem>>, vector<8x128xf32>
    tpu.vector_store %arg4[%c0_7, %c0_8], %16 {strides = array<i32>} : memref<8x128xf32, #tpu.memory_space<vmem>>, vector<8x128xf32>,
    return
  }
  func.func @transform_0(%arg0: i32) -> (i32, i32) {
    %c0_i32 = arith.constant 0 : i32
    %c0_i32_0 = arith.constant 0 : i32
    return %arg0, %c0_i32 : i32, i32
  }
  func.func @transform_1(%arg0: i32) -> (i32, i32) {
    %c0_i32 = arith.constant 0 : i32
    %c0_i32_0 = arith.constant 0 : i32
    %c0_i32_1 = arith.constant 0 : i32
    return %c0_i32, %c0_i32_0 : i32, i32
  }
  func.func @transform_2(%arg0: i32) -> (i32, i32) {
    %c0_i32 = arith.constant 0 : i32
    %c0_i32_0 = arith.constant 0 : i32
    %c0_i32_1 = arith.constant 0 : i32
    return %c0_i32, %c0_i32_0 : i32, i32
  }
  func.func @transform_3(%arg0: i32) -> (i32, i32) {
    %c0_i32 = arith.constant 0 : i32
    %c0_i32_0 = arith.constant 0 : i32
    return %arg0, %c0_i32 : i32, i32
  }
}

</mosaic_0001>

<llo_original>
// kernel: tpu_custom_call.1
$region0: #{tpu_custom_call.1}
  #allocation0 [shape = 'u32[]', space=smem, size = 0x4, offset = 0x4, fixed_abs, tag = 'smem constant byte address 0x4 - core index']
  #allocation1 [shape = 'u32[144,128]{1,0:T(1,128)}', space=vmem, size = 0x12000, scoped, tag = 'internal scratch']
  %s0 = inlined_call_operand.hbm [shape: f32[16,128], index: 0, kind: input, shape index: {}]
  %s1 = inlined_call_operand.hbm [shape: bf16[128,128], index: 1, kind: input, shape index: {}]
  %s2 = inlined_call_operand.vmem [shape: f32[1,128], index: 2, kind: input, shape index: {}]
  %s3 = inlined_call_operand.hbm [shape: f32[16,128], index: 3, kind: output, shape index: {}]
  %s4 = sld [smem:[#allocation0]]
  $region53: #{tpu_custom_call.1} parent=0
    _
  %s6 = ssub.s32 1, %s4
  %s7 = scalar_select 0, %s6, %s4
  $region1: #{tpu_custom_call.1} parent=0
    #allocation2 [shape = 'u8[8192]{0}', space=vmem, size = 0x2000, scoped, tag = 'input window, operand 0']
    #allocation3 [shape = 's32[2]{0}', space=sflag, size = 0x8, scoped, tag = 'scoped memory for tpu_custom_call.1']
    #allocation4 [shape = 's32[2]{0}', space=sflag, size = 0x8, scoped, tag = 'scoped memory for tpu_custom_call.1']
    #allocation5 [shape = 'u8[32768]{0}', space=vmem, size = 0x8000, scoped, tag = 'input window, operand 1, single buffered']
    #allocation6 [shape = 's32[1]{0}', space=sflag, size = 0x4, scoped, tag = 'scoped memory for tpu_custom_call.1']
    #allocation7 [shape = 'u8[8192]{0}', space=vmem, size = 0x2000, scoped, tag = 'output window, operand 0']
    %8 = vsyncpa [#allocation3], 0
    %s9 = scalar_lea.sflag [#allocation3], 1
    %10 = vsyncpa %s9, 0
    %11 = vsyncpa [#allocation6], 0
    %12 = vsyncpa [#allocation4], 0
    %s13 = scalar_lea.sflag [#allocation4], 1
    %14 = vsyncpa %s13, 0
    loop: start=0, step=1, limit=4
    $region2: #{tpu_custom_call.1} parent=1 // loop_pre_header
      _
    $region3: #{tpu_custom_call.1} parent=1 // loop_header
      %s16 = sphi 0, %s20
      %p17 = scmp.ge.s32.totalorder %s16, 4
      %s26 = sphi 0, %s28
      %s29 = sphi 0, %s26
      %s30 = sphi 0, %s29
      %s46 = sphi 0, %s30
      %s50 = sphi 0, %s50
      %s52 = sphi 0, %s50
      %s53 = sphi 0, %s52
      %s67 = sphi 0, %s53
      %s71 = sphi 0, %s71
      %s73 = sphi 0, %s71
      %s74 = sphi 0, %s73
      %s88 = sphi 0, %s74
      %s94 = sphi 0, %s96
      %s97 = sphi 0, %s94
      %s98 = sphi 0, %s97
      %s114 = sphi 0, %s98
    $region4: #{tpu_custom_call.1} parent=1 // loop_header_branch
      %19 = sbr.rel (%p17) target = $region8
    $region5: #{tpu_custom_call.1} parent=1 // loop_body
      %s21 = ssub.s32 %s16, 1
      %s22 = ssub.s32 %s16, 2
      %s23 = sadd.s32 %s16, 1
      %s24 = ssub.s32 %s16, %s23
      %p25 = scmp.eq.s32.totalorder %s24, 0
      %s27 = sadd.s32 %s26, 1
      %s28 = scalar_select %p25, %s26, %s27
      %p31 = pneg %p25
      %p32 = scmp.eq.s32.totalorder %s16, 1
      %p33 = por %p31, %p32
      %p34 = scmp.ne.s32.totalorder %s26, %s29
      %p35 = scmp.eq.s32.totalorder %s16, 0
      %p36 = por %p34, %p35
      %p37 = scmp.ne.s32.totalorder %s26, %s29
      %p38 = scmp.eq.s32.totalorder %s21, 1
      %p39 = por %p37, %p38
      %p40 = scmp.ne.s32.totalorder %s29, %s30
      %p41 = scmp.eq.s32.totalorder %s21, 0
      %p42 = por %p40, %p41
      %p43 = scmp.ne.s32.totalorder %s29, %s30
      %p44 = scmp.eq.s32.totalorder %s22, 1
      %p45 = por %p43, %p44
      %p47 = scmp.ne.s32.totalorder %s30, %s46
      %p48 = scmp.eq.s32.totalorder %s22, 0
      %p49 = por %p47, %p48
      %s51 = sadd.s32 %s50, 1
      %p54 = scmp.eq.s32.totalorder %s16, 1
      %p55 = scmp.ne.s32.totalorder %s50, %s52
      %p56 = scmp.eq.s32.totalorder %s16, 0
      %p57 = por %p55, %p56
      %p58 = scmp.ne.s32.totalorder %s50, %s52
      %p59 = scmp.eq.s32.totalorder %s21, 1
      %p60 = por %p58, %p59
      %p61 = scmp.ne.s32.totalorder %s52, %s53
      %p62 = scmp.eq.s32.totalorder %s21, 0
      %p63 = por %p61, %p62
      %p64 = scmp.ne.s32.totalorder %s52, %s53
      %p65 = scmp.eq.s32.totalorder %s22, 1
      %p66 = por %p64, %p65
      %p68 = scmp.ne.s32.totalorder %s53, %s67
      %p69 = scmp.eq.s32.totalorder %s22, 0
      %p70 = por %p68, %p69
      %s72 = sadd.s32 %s71, 1
      %p75 = scmp.eq.s32.totalorder %s16, 1
      %p76 = scmp.ne.s32.totalorder %s71, %s73
      %p77 = scmp.eq.s32.totalorder %s16, 0
      %p78 = por %p76, %p77
      %p79 = scmp.ne.s32.totalorder %s71, %s73
      %p80 = scmp.eq.s32.totalorder %s21, 1
      %p81 = por %p79, %p80
      %p82 = scmp.ne.s32.totalorder %s73, %s74
      %p83 = scmp.eq.s32.totalorder %s21, 0
      %p84 = por %p82, %p83
      %p85 = scmp.ne.s32.totalorder %s73, %s74
      %p86 = scmp.eq.s32.totalorder %s22, 1
      %p87 = por %p85, %p86
      %p89 = scmp.ne.s32.totalorder %s74, %s88
      %p90 = scmp.eq.s32.totalorder %s22, 0
      %p91 = por %p89, %p90
      %s92 = ssub.s32 %s16, %s23
      %p93 = scmp.eq.s32.totalorder %s92, 0
      %s95 = sadd.s32 %s94, 1
      %s96 = scalar_select %p93, %s94, %s95
      %p99 = pneg %p93
      %p100 = scmp.eq.s32.totalorder %s16, 1
      %p101 = por %p99, %p100
      %p102 = scmp.ne.s32.totalorder %s94, %s97
      %p103 = scmp.eq.s32.totalorder %s16, 0
      %p104 = por %p102, %p103
      %p105 = scmp.ne.s32.totalorder %s94, %s97
      %p106 = scmp.eq.s32.totalorder %s21, 1
      %p107 = por %p105, %p106
      %p108 = scmp.ne.s32.totalorder %s97, %s98
      %p109 = scmp.eq.s32.totalorder %s21, 0
      %p110 = por %p108, %p109
      %p111 = scmp.ne.s32.totalorder %s97, %s98
      %p112 = scmp.eq.s32.totalorder %s22, 1
      %p113 = por %p111, %p112
      %p115 = scmp.ne.s32.totalorder %s98, %s114
      %p116 = scmp.eq.s32.totalorder %s22, 0
      %p117 = por %p115, %p116
      %p118 = scmp.le.s32.totalorder 1, %s16
      %p119 = scmp.lt.s32.totalorder %s16, 3
      %p120 = pnand %p118, %p119
      %p121 = pneg %p120
      // Predicated region
      $region9: #{tpu_custom_call.1} parent=5 // pred_check
        _
      $region10: #{tpu_custom_call.1} parent=5 // pred_check_branch
        %123 = sbr.rel (%p120) target = $region12
      $region11: #{tpu_custom_call.1} parent=5 // pred_region
        %s124 = ssub.s32 %s16, 1
        // Predicated region
        $region13: #{tpu_custom_call.1} parent=11 // pred_check
          %p125 = pneg %p63
        $region14: #{tpu_custom_call.1} parent=11 // pred_check_branch
          %127 = sbr.rel (%p125) target = $region16
        $region15: #{tpu_custom_call.1} parent=11 // pred_region
          %s129 = ssub.s32 1024, 1024
          %130 = vsyncadd [#allocation6], %s129
          %s131 = sshll.u32 [#allocation5], 4
          %s132 = int_to_ptr.vmem [resolvable:$true] %s131
          %137 = dma.hbm_to_vmem [thread:$0]  %s1, 1024, %s132, [#allocation6], 64, 64, 4
        $region16: #{tpu_custom_call.1} parent=11 // pred_fallthru
          _
        // Predicated region
        $region17: #{tpu_custom_call.1} parent=11 // pred_check
          %p138 = pneg %p84
        $region18: #{tpu_custom_call.1} parent=11 // pred_check_branch
          %140 = sbr.rel (%p138) target = $region20
        $region19: #{tpu_custom_call.1} parent=11 // pred_region
          _
        $region20: #{tpu_custom_call.1} parent=11 // pred_fallthru
          _
      $region12: #{tpu_custom_call.1} parent=5 // pred_fallthru
        _
      %p141 = scmp.lt.s32.totalorder %s16, 2
      // Predicated region
      $region21: #{tpu_custom_call.1} parent=5 // pred_check
        %p142 = pneg %p141
      $region22: #{tpu_custom_call.1} parent=5 // pred_check_branch
        %144 = sbr.rel (%p142) target = $region24
      $region23: #{tpu_custom_call.1} parent=5 // pred_region
        // Predicated region
        $region25: #{tpu_custom_call.1} parent=23 // pred_check
          %p145 = pneg %p36
        $region26: #{tpu_custom_call.1} parent=23 // pred_check_branch
          %147 = sbr.rel (%p145) target = $region28
        $region27: #{tpu_custom_call.1} parent=23 // pred_region
          %s148 = sand.u32 %s26, 1
          %s149 = scalar_lea.sflag [#allocation3], %s148
          %s150 = sand.u32 %s26, 1
          %s151 = smul.addr %s150, 8
          %s152 = scalar_lea.vmem [#allocation2], %s151
          %s154 = ssub.s32 128, 128
          %155 = vsyncadd %s149, %s154
          %s156 = smul.addr %s16, 128
          %s157 = scalar_lea.hbm %s0, %s156
          %s159 = sshll.u32 %s152, 4
          %s160 = int_to_ptr.vmem [resolvable:$true] %s159
          %162 = dma.hbm_to_vmem [thread:$0]  %s157, 128, %s160, %s149
        $region28: #{tpu_custom_call.1} parent=23 // pred_fallthru
          _
      $region24: #{tpu_custom_call.1} parent=5 // pred_fallthru
        _
      %p163 = scmp.le.s32.totalorder 1, %s16
      %p164 = scmp.lt.s32.totalorder %s16, 3
      %p165 = pnand %p163, %p164
      %p166 = pneg %p165
      // Predicated region
      $region29: #{tpu_custom_call.1} parent=5 // pred_check
        _
      $region30: #{tpu_custom_call.1} parent=5 // pred_check_branch
        %168 = sbr.rel (%p165) target = $region32
      $region31: #{tpu_custom_call.1} parent=5 // pred_region
        %s169 = ssub.s32 %s16, 1
        %s170 = sand.u32 %s29, 1
        %s171 = scalar_lea.sflag [#allocation3], %s170
        %s172 = sand.u32 %s29, 1
        %s173 = smul.addr %s172, 8
        %s174 = scalar_lea.vmem [#allocation2], %s173
        // Predicated region
        $region33: #{tpu_custom_call.1} parent=31 // pred_check
          %p175 = pneg %p42
        $region34: #{tpu_custom_call.1} parent=31 // pred_check_branch
          %177 = sbr.rel (%p175) target = $region36
        $region35: #{tpu_custom_call.1} parent=31 // pred_region
          %178 = dma.done %s171, 128
        $region36: #{tpu_custom_call.1} parent=31 // pred_fallthru
          _
        // Predicated region
        $region37: #{tpu_custom_call.1} parent=31 // pred_check
          %p179 = pneg %p63
        $region38: #{tpu_custom_call.1} parent=31 // pred_check_branch
          %181 = sbr.rel (%p179) target = $region40
        $region39: #{tpu_custom_call.1} parent=31 // pred_region
          %182 = dma.done [#allocation6], 1024
        $region40: #{tpu_custom_call.1} parent=31 // pred_fallthru
          _
        %s183 = sand.u32 %s29, 1
        %s184 = scalar_lea.sflag [#allocation3], %s183
        %s185 = sand.u32 %s29, 1
        %s186 = smul.addr %s185, 8
        %s187 = scalar_lea.vmem [#allocation2], %s186
        %p188 = pneg %p42
        %p189 = pneg %p39
        %p190 = pneg %p63
        %p191 = pneg %p60
        %p192 = pneg %p84
        %p193 = pneg %p81
        %p194 = pneg %p110
        %p195 = pneg %p107
        %s196 = sand.u32 %s97, 1
        %s197 = scalar_lea.sflag [#allocation4], %s196
        %s198 = sand.u32 %s97, 1
        %s199 = smul.addr %s198, 8
        %s200 = scalar_lea.vmem [#allocation7], %s199
        %v202 = vld [vmem:[%s174] sm:$0xff]
        %v203 = vpack.c.bf16 %v202, %v202
        %v204 = vld [vmem:[#allocation5] sm:$0xf]
        %v205 = vld [vmem:[#allocation5 + $0x4] sm:$0xf]
        %v206 = vld [vmem:[#allocation5 + $0x8] sm:$0xf]
        %v207 = vld [vmem:[#allocation5 + $0xc] sm:$0xf]
        %v208 = vld [vmem:[#allocation5 + $0x10] sm:$0xf]
        %v209 = vld [vmem:[#allocation5 + $0x14] sm:$0xf]
        %v210 = vld [vmem:[#allocation5 + $0x18] sm:$0xf]
        %v211 = vld [vmem:[#allocation5 + $0x1c] sm:$0xf]
        %v212 = vld [vmem:[#allocation5 + $0x20] sm:$0xf]
        %v213 = vld [vmem:[#allocation5 + $0x24] sm:$0xf]
        %v214 = vld [vmem:[#allocation5 + $0x28] sm:$0xf]
        %v215 = vld [vmem:[#allocation5 + $0x2c] sm:$0xf]
        %v216 = vld [vmem:[#allocation5 + $0x30] sm:$0xf]
        %v217 = vld [vmem:[#allocation5 + $0x34] sm:$0xf]
        %v218 = vld [vmem:[#allocation5 + $0x38] sm:$0xf]
        %v219 = vld [vmem:[#allocation5 + $0x3c] sm:$0xf]
        %v220 = vld [vmem:[%s2] sm:$0x1]
        %v222 = vlaneseq
        %v223 = vshrl.u32 %v222, 7
        %v224 = vsub.s32 0, %v223
        %v225 = vrot.slane %v220, %v224
        %v243 = vunpack.c.l.b16 %v204
        %v244 = vunpack.c.l.b16 %v205
        %v245 = vunpack.c.l.b16 %v206
        %v246 = vunpack.c.l.b16 %v207
        %v247 = vunpack.c.l.b16 %v208
        %v248 = vunpack.c.l.b16 %v209
        %v249 = vunpack.c.l.b16 %v210
        %v250 = vunpack.c.l.b16 %v211
        %v251 = vunpack.c.l.b16 %v212
        %v252 = vunpack.c.l.b16 %v213
        %v253 = vunpack.c.l.b16 %v214
        %v254 = vunpack.c.l.b16 %v215
        %v255 = vunpack.c.l.b16 %v216
        %v256 = vunpack.c.l.b16 %v217
        %v257 = vunpack.c.l.b16 %v218
        %v258 = vunpack.c.l.b16 %v219
        %v259 = vpack.c.b16 %v244, %v243
        %v260 = vpack.c.b16 %v246, %v245
        %v261 = vpack.c.b16 %v248, %v247
        %v262 = vpack.c.b16 %v250, %v249
        %v263 = vpack.c.b16 %v252, %v251
        %v264 = vpack.c.b16 %v254, %v253
        %v265 = vpack.c.b16 %v256, %v255
        %v266 = vpack.c.b16 %v258, %v257
        %275 = vmatprep.subr.bf16.mxu0 0
        %276 = vmatpush1.bf16.xpose.msra.mxu0 %v266
        %277 = vmatprep.subr.bf16.mxu0 0
        %278 = vmatpush1.bf16.xpose.msra.mxu0 %v265
        %279 = vmatprep.subr.bf16.mxu0 0
        %280 = vmatpush1.bf16.xpose.msra.mxu0 %v264
        %281 = vmatprep.subr.bf16.mxu0 0
        %282 = vmatpush1.bf16.xpose.msra.mxu0 %v263
        %283 = vmatprep.subr.bf16.mxu0 0
        %284 = vmatpush1.bf16.xpose.msra.mxu0 %v262
        %285 = vmatprep.subr.bf16.mxu0 0
        %286 = vmatpush1.bf16.xpose.msra.mxu0 %v261
        %287 = vmatprep.subr.bf16.mxu0 0
        %288 = vmatpush1.bf16.xpose.msra.mxu0 %v260
        %289 = vmatprep.subr.bf16.mxu0 0
        %290 = vmatpush1.bf16.xpose.msra.mxu0 %v259
        %291 = vmatprep.subr.bf16.mxu0 0
        %292 = vmatpush2.bf16.xpose.msra.mxu0 0
        %293 = vmatprep.subr.bf16.mxu0 0
        %294 = vmatpush2.bf16.xpose.msra.mxu0 0
        %295 = vmatprep.subr.bf16.mxu0 0
        %296 = vmatpush2.bf16.xpose.msra.mxu0 0
        %297 = vmatprep.subr.bf16.mxu0 0
        %298 = vmatpush2.bf16.xpose.msra.mxu0 0
        %299 = vmatprep.subr.bf16.mxu0 0
        %300 = vmatpush2.bf16.xpose.msra.mxu0 0
        %301 = vmatprep.subr.bf16.mxu0 0
        %302 = vmatpush2.bf16.xpose.msra.mxu0 0
        %303 = vmatprep.subr.bf16.mxu0 0
        %304 = vmatpush2.bf16.xpose.msra.mxu0 0
        %305 = vmatprep.subr.bf16.mxu0 0
        %306 = vmatpush2.bf16.xpose.msra.mxu0 0
        %307 = vmatprep.mubr.bf16.mxu0 0
        %308 = vmatmul.mubr.bf16.gmra.mxu0 %v203
        %v309 = vpop.f32.mrf.mxu0
        %v310 = vadd.f32 %v225, %v309
        %v311 = vpop.f32.mrf.mxu0
        %v312 = vpop.f32.mrf.mxu0
        %v313 = vpop.f32.mrf.mxu0
        %314 = vdwg.mxu0
        %315 = vmax.xlane.f32.xlu0 %v310
        %v316 = vpop.xlane.xlu0 %315
        %v317 = vsub.f32 %v310, %v316
        %v318 = vmul.f32 %v317, 1.442695
        %v319 = vpow.pop %v318
        %320 = vadd.xlane.f32.xlu0 %v319
        %v321 = vpop.xlane.xlu0 %320
        %v322 = vlog2.pop %v321
        %v323 = vmul.f32 %v322, 0.6931472
        %v324 = vsub.f32 %v317, %v323
        %325 = vst [vmem:[%s200] sm:$0xff] %v324
        %s326 = sand.u32 %s97, 1
        %s327 = scalar_lea.sflag [#allocation4], %s326
        %s328 = sand.u32 %s97, 1
        %s329 = smul.addr %s328, 8
        %s330 = scalar_lea.vmem [#allocation7], %s329
        // Predicated region
        $region41: #{tpu_custom_call.1} parent=31 // pred_check
          %p331 = pneg %p107
        $region42: #{tpu_custom_call.1} parent=31 // pred_check_branch
          %333 = sbr.rel (%p331) target = $region44
        $region43: #{tpu_custom_call.1} parent=31 // pred_region
          %s335 = ssub.s32 128, 128
          %336 = vsyncadd %s327, %s335
          %s337 = smul.addr %s21, 128
          %s338 = scalar_lea.hbm %s3, %s337
          %s340 = sshll.u32 %s330, 4
          %s341 = int_to_ptr.vmem [resolvable:$true] %s340
          %343 = dma.vmem_to_hbm [thread:$0]  %s341, 128, %s338, %s327
        $region44: #{tpu_custom_call.1} parent=31 // pred_fallthru
          _
      $region32: #{tpu_custom_call.1} parent=5 // pred_fallthru
        _
      %p344 = scmp.le.s32.totalorder 2, %s16
      // Predicated region
      $region45: #{tpu_custom_call.1} parent=5 // pred_check
        %p345 = pneg %p344
      $region46: #{tpu_custom_call.1} parent=5 // pred_check_branch
        %347 = sbr.rel (%p345) target = $region48
      $region47: #{tpu_custom_call.1} parent=5 // pred_region
        %s348 = ssub.s32 %s16, 2
        // Predicated region
        $region49: #{tpu_custom_call.1} parent=47 // pred_check
          %p349 = pneg %p113
        $region50: #{tpu_custom_call.1} parent=47 // pred_check_branch
          %351 = sbr.rel (%p349) target = $region52
        $region51: #{tpu_custom_call.1} parent=47 // pred_region
          %s352 = sand.u32 %s98, 1
          %s353 = scalar_lea.sflag [#allocation4], %s352
          %s354 = sand.u32 %s98, 1
          %s355 = smul.addr %s354, 8
          %s356 = scalar_lea.vmem [#allocation7], %s355
          %357 = dma.done %s353, 128
        $region52: #{tpu_custom_call.1} parent=47 // pred_fallthru
          _
      $region48: #{tpu_custom_call.1} parent=5 // pred_fallthru
        _
    $region6: #{tpu_custom_call.1} parent=1 // loop_footer
      %s20 = sadd.s32 1, %s16
    $region7: #{tpu_custom_call.1} parent=1 // loop_footer_branch
      %15 = sbr.rel target = $region3
    $region8: #{tpu_custom_call.1} parent=1 // loop_exit
      _
    %358 = vsyncpa [#allocation3], 1
    %s359 = scalar_lea.sflag [#allocation3], 1
    %360 = vsyncpa %s359, 1
    %361 = vsyncpa [#allocation6], 1
    %362 = vsyncpa [#allocation4], 1
    %s363 = scalar_lea.sflag [#allocation4], 1
    %364 = vsyncpa %s363, 1

// kernel: tpu_custom_call.1
$region0: #{tpu_custom_call.1}
  #allocation0 [shape = 'u32[]', space=smem, size = 0x4, offset = 0x4, fixed_abs, tag = 'smem constant byte address 0x4 - core index']
  #allocation1 [shape = 'u32[144,128]{1,0:T(1,128)}', space=vmem, size = 0x12000, scoped, tag = 'internal scratch']
  %s0 = inlined_call_operand.hbm [shape: f32[16,128], index: 0, kind: input, shape index: {}]
  %s1 = inlined_call_operand.hbm [shape: bf16[128,128], index: 1, kind: input, shape index: {}]
  %s2 = inlined_call_operand.vmem [shape: f32[1,128], index: 2, kind: input, shape index: {}]
  %s3 = inlined_call_operand.hbm [shape: f32[16,128], index: 3, kind: output, shape index: {}]
  %s4 = sld [smem:[#allocation0]]
  $region53: #{tpu_custom_call.1} parent=0
    _
  %s6 = ssub.s32 1, %s4
  %s7 = scalar_select 0, %s6, %s4
  $region1: #{tpu_custom_call.1} parent=0
    #allocation2 [shape = 'u8[8192]{0}', space=vmem, size = 0x2000, scoped, tag = 'input window, operand 0']
    #allocation3 [shape = 's32[2]{0}', space=sflag, size = 0x8, scoped, tag = 'scoped memory for tpu_custom_call.1']
    #allocation4 [shape = 's32[2]{0}', space=sflag, size = 0x8, scoped, tag = 'scoped memory for tpu_custom_call.1']
    #allocation5 [shape = 'u8[32768]{0}', space=vmem, size = 0x8000, scoped, tag = 'input window, operand 1, single buffered']
    #allocation6 [shape = 's32[1]{0}', space=sflag, size = 0x4, scoped, tag = 'scoped memory for tpu_custom_call.1']
    #allocation7 [shape = 'u8[8192]{0}', space=vmem, size = 0x2000, scoped, tag = 'output window, operand 0']
    %8 = vsyncpa [#allocation3], 0
    %s9 = scalar_lea.sflag [#allocation3], 1
    %10 = vsyncpa %s9, 0
    %11 = vsyncpa [#allocation6], 0
    %12 = vsyncpa [#allocation4], 0
    %s13 = scalar_lea.sflag [#allocation4], 1
    %14 = vsyncpa %s13, 0
    loop: start=0, step=1, limit=4
    $region2: #{tpu_custom_call.1} parent=1 // loop_pre_header
      _
    $region3: #{tpu_custom_call.1} parent=1 // loop_header
      %s16 = sphi 0, %s20
      %p17 = scmp.ge.s32.totalorder %s16, 4
      %s26 = sphi 0, %s28
      %s29 = sphi 0, %s26
      %s30 = sphi 0, %s29
      %s46 = sphi 0, %s30
      %s50 = sphi 0, %s50
      %s52 = sphi 0, %s50
      %s53 = sphi 0, %s52
      %s67 = sphi 0, %s53
      %s71 = sphi 0, %s71
      %s73 = sphi 0, %s71
      %s74 = sphi 0, %s73
      %s88 = sphi 0, %s74
      %s94 = sphi 0, %s96
      %s97 = sphi 0, %s94
      %s98 = sphi 0, %s97
      %s114 = sphi 0, %s98
    $region4: #{tpu_custom_call.1} parent=1 // loop_header_branch
      %19 = sbr.rel (%p17) target = $region8
    $region5: #{tpu_custom_call.1} parent=1 // loop_body
      %s21 = ssub.s32 %s16, 1
      %s22 = ssub.s32 %s16, 2
      %s23 = sadd.s32 %s16, 1
      %s24 = ssub.s32 %s16, %s23
      %p25 = scmp.eq.s32.totalorder %s24, 0
      %s27 = sadd.s32 %s26, 1
      %s28 = scalar_select %p25, %s26, %s27
      %p31 = pneg %p25
      %p32 = scmp.eq.s32.totalorder %s16, 1
      %p33 = por %p31, %p32
      %p34 = scmp.ne.s32.totalorder %s26, %s29
      %p35 = scmp.eq.s32.totalorder %s16, 0
      %p36 = por %p34, %p35
      %p37 = scmp.ne.s32.totalorder %s26, %s29
      %p38 = scmp.eq.s32.totalorder %s21, 1
      %p39 = por %p37, %p38
      %p40 = scmp.ne.s32.totalorder %s29, %s30
      %p41 = scmp.eq.s32.totalorder %s21, 0
      %p42 = por %p40, %p41
      %p43 = scmp.ne.s32.totalorder %s29, %s30
      %p44 = scmp.eq.s32.totalorder %s22, 1
      %p45 = por %p43, %p44
      %p47 = scmp.ne.s32.totalorder %s30, %s46
      %p48 = scmp.eq.s32.totalorder %s22, 0
      %p49 = por %p47, %p48
      %s51 = sadd.s32 %s50, 1
      %p54 = scmp.eq.s32.totalorder %s16, 1
      %p55 = scmp.ne.s32.totalorder %s50, %s52
      %p56 = scmp.eq.s32.totalorder %s16, 0
      %p57 = por %p55, %p56
      %p58 = scmp.ne.s32.totalorder %s50, %s52
      %p59 = scmp.eq.s32.totalorder %s21, 1
      %p60 = por %p58, %p59
      %p61 = scmp.ne.s32.totalorder %s52, %s53
      %p62 = scmp.eq.s32.totalorder %s21, 0
      %p63 = por %p61, %p62
      %p64 = scmp.ne.s32.totalorder %s52, %s53
      %p65 = scmp.eq.s32.totalorder %s22, 1
      %p66 = por %p64, %p65
      %p68 = scmp.ne.s32.totalorder %s53, %s67
      %p69 = scmp.eq.s32.totalorder %s22, 0
      %p70 = por %p68, %p69
      %s72 = sadd.s32 %s71, 1
      %p75 = scmp.eq.s32.totalorder %s16, 1
      %p76 = scmp.ne.s32.totalorder %s71, %s73
      %p77 = scmp.eq.s32.totalorder %s16, 0
      %p78 = por %p76, %p77
      %p79 = scmp.ne.s32.totalorder %s71, %s73
      %p80 = scmp.eq.s32.totalorder %s21, 1
      %p81 = por %p79, %p80
      %p82 = scmp.ne.s32.totalorder %s73, %s74
      %p83 = scmp.eq.s32.totalorder %s21, 0
      %p84 = por %p82, %p83
      %p85 = scmp.ne.s32.totalorder %s73, %s74
      %p86 = scmp.eq.s32.totalorder %s22, 1
      %p87 = por %p85, %p86
      %p89 = scmp.ne.s32.totalorder %s74, %s88
      %p90 = scmp.eq.s32.totalorder %s22, 0
      %p91 = por %p89, %p90
      %s92 = ssub.s32 %s16, %s23
      %p93 = scmp.eq.s32.totalorder %s92, 0
      %s95 = sadd.s32 %s94, 1
      %s96 = scalar_select %p93, %s94, %s95
      %p99 = pneg %p93
      %p100 = scmp.eq.s32.totalorder %s16, 1
      %p101 = por %p99, %p100
      %p102 = scmp.ne.s32.totalorder %s94, %s97
      %p103 = scmp.eq.s32.totalorder %s16, 0
      %p104 = por %p102, %p103
      %p105 = scmp.ne.s32.totalorder %s94, %s97
      %p106 = scmp.eq.s32.totalorder %s21, 1
      %p107 = por %p105, %p106
      %p108 = scmp.ne.s32.totalorder %s97, %s98
      %p109 = scmp.eq.s32.totalorder %s21, 0
      %p110 = por %p108, %p109
      %p111 = scmp.ne.s32.totalorder %s97, %s98
      %p112 = scmp.eq.s32.totalorder %s22, 1
      %p113 = por %p111, %p112
      %p115 = scmp.ne.s32.totalorder %s98, %s114
      %p116 = scmp.eq.s32.totalorder %s22, 0
      %p117 = por %p115, %p116
      %p118 = scmp.le.s32.totalorder 1, %s16
      %p119 = scmp.lt.s32.totalorder %s16, 3
      %p120 = pnand %p118, %p119
      %p121 = pneg %p120
      // Predicated region
      $region9: #{tpu_custom_call.1} parent=5 // pred_check
        _
      $region10: #{tpu_custom_call.1} parent=5 // pred_check_branch
        %123 = sbr.rel (%p120) target = $region12
      $region11: #{tpu_custom_call.1} parent=5 // pred_region
        %s124 = ssub.s32 %s16, 1
        // Predicated region
        $region13: #{tpu_custom_call.1} parent=11 // pred_check
          %p125 = pneg %p63
        $region14: #{tpu_custom_call.1} parent=11 // pred_check_branch
          %127 = sbr.rel (%p125) target = $region16
        $region15: #{tpu_custom_call.1} parent=11 // pred_region
          %s129 = ssub.s32 1024, 1024
          %130 = vsyncadd [#allocation6], %s129
          %s131 = sshll.u32 [#allocation5], 4
          %s132 = int_to_ptr.vmem [resolvable:$true] %s131
          %137 = dma.hbm_to_vmem [thread:$0]  %s1, 1024, %s132, [#allocation6], 64, 64, 4
        $region16: #{tpu_custom_call.1} parent=11 // pred_fallthru
          _
        // Predicated region
        $region17: #{tpu_custom_call.1} parent=11 // pred_check
          %p138 = pneg %p84
        $region18: #{tpu_custom_call.1} parent=11 // pred_check_branch
          %140 = sbr.rel (%p138) target = $region20
        $region19: #{tpu_custom_call.1} parent=11 // pred_region
          _
        $region20: #{tpu_custom_call.1} parent=11 // pred_fallthru
          _
      $region12: #{tpu_custom_call.1} parent=5 // pred_fallthru
        _
      %p141 = scmp.lt.s32.totalorder %s16, 2
      // Predicated region
      $region21: #{tpu_custom_call.1} parent=5 // pred_check
        %p142 = pneg %p141
      $region22: #{tpu_custom_call.1} parent=5 // pred_check_branch
        %144 = sbr.rel (%p142) target = $region24
      $region23: #{tpu_custom_call.1} parent=5 // pred_region
        // Predicated region
        $region25: #{tpu_custom_call.1} parent=23 // pred_check
          %p145 = pneg %p36
        $region26: #{tpu_custom_call.1} parent=23 // pred_check_branch
          %147 = sbr.rel (%p145) target = $region28
        $region27: #{tpu_custom_call.1} parent=23 // pred_region
          %s148 = sand.u32 %s26, 1
          %s149 = scalar_lea.sflag [#allocation3], %s148
          %s150 = sand.u32 %s26, 1
          %s151 = smul.addr %s150, 8
          %s152 = scalar_lea.vmem [#allocation2], %s151
          %s154 = ssub.s32 128, 128
          %155 = vsyncadd %s149, %s154
          %s156 = smul.addr %s16, 128
          %s157 = scalar_lea.hbm %s0, %s156
          %s159 = sshll.u32 %s152, 4
          %s160 = int_to_ptr.vmem [resolvable:$true] %s159
          %162 = dma.hbm_to_vmem [thread:$0]  %s157, 128, %s160, %s149
        $region28: #{tpu_custom_call.1} parent=23 // pred_fallthru
          _
      $region24: #{tpu_custom_call.1} parent=5 // pred_fallthru
        _
      %p163 = scmp.le.s32.totalorder 1, %s16
      %p164 = scmp.lt.s32.totalorder %s16, 3
      %p165 = pnand %p163, %p164
      %p166 = pneg %p165
      // Predicated region
      $region29: #{tpu_custom_call.1} parent=5 // pred_check
        _
      $region30: #{tpu_custom_call.1} parent=5 // pred_check_branch
        %168 = sbr.rel (%p165) target = $region32
      $region31: #{tpu_custom_call.1} parent=5 // pred_region
        %s169 = ssub.s32 %s16, 1
        %s170 = sand.u32 %s29, 1
        %s171 = scalar_lea.sflag [#allocation3], %s170
        %s172 = sand.u32 %s29, 1
        %s173 = smul.addr %s172, 8
        %s174 = scalar_lea.vmem [#allocation2], %s173
        // Predicated region
        $region33: #{tpu_custom_call.1} parent=31 // pred_check
          %p175 = pneg %p42
        $region34: #{tpu_custom_call.1} parent=31 // pred_check_branch
          %177 = sbr.rel (%p175) target = $region36
        $region35: #{tpu_custom_call.1} parent=31 // pred_region
          %178 = dma.done %s171, 128
        $region36: #{tpu_custom_call.1} parent=31 // pred_fallthru
          _
        // Predicated region
        $region37: #{tpu_custom_call.1} parent=31 // pred_check
          %p179 = pneg %p63
        $region38: #{tpu_custom_call.1} parent=31 // pred_check_branch
          %181 = sbr.rel (%p179) target = $region40
        $region39: #{tpu_custom_call.1} parent=31 // pred_region
          %182 = dma.done [#allocation6], 1024
        $region40: #{tpu_custom_call.1} parent=31 // pred_fallthru
          _
        %s183 = sand.u32 %s29, 1
        %s184 = scalar_lea.sflag [#allocation3], %s183
        %s185 = sand.u32 %s29, 1
        %s186 = smul.addr %s185, 8
        %s187 = scalar_lea.vmem [#allocation2], %s186
        %p188 = pneg %p42
        %p189 = pneg %p39
        %p190 = pneg %p63
        %p191 = pneg %p60
        %p192 = pneg %p84
        %p193 = pneg %p81
        %p194 = pneg %p110
        %p195 = pneg %p107
        %s196 = sand.u32 %s97, 1
        %s197 = scalar_lea.sflag [#allocation4], %s196
        %s198 = sand.u32 %s97, 1
        %s199 = smul.addr %s198, 8
        %s200 = scalar_lea.vmem [#allocation7], %s199
        %v202 = vld [vmem:[%s174] sm:$0xff]
        %v203 = vpack.c.bf16 %v202, %v202
        %v204 = vld [vmem:[#allocation5] sm:$0xf]
        %v205 = vld [vmem:[#allocation5 + $0x4] sm:$0xf]
        %v206 = vld [vmem:[#allocation5 + $0x8] sm:$0xf]
        %v207 = vld [vmem:[#allocation5 + $0xc] sm:$0xf]
        %v208 = vld [vmem:[#allocation5 + $0x10] sm:$0xf]
        %v209 = vld [vmem:[#allocation5 + $0x14] sm:$0xf]
        %v210 = vld [vmem:[#allocation5 + $0x18] sm:$0xf]
        %v211 = vld [vmem:[#allocation5 + $0x1c] sm:$0xf]
        %v212 = vld [vmem:[#allocation5 + $0x20] sm:$0xf]
        %v213 = vld [vmem:[#allocation5 + $0x24] sm:$0xf]
        %v214 = vld [vmem:[#allocation5 + $0x28] sm:$0xf]
        %v215 = vld [vmem:[#allocation5 + $0x2c] sm:$0xf]
        %v216 = vld [vmem:[#allocation5 + $0x30] sm:$0xf]
        %v217 = vld [vmem:[#allocation5 + $0x34] sm:$0xf]
        %v218 = vld [vmem:[#allocation5 + $0x38] sm:$0xf]
        %v219 = vld [vmem:[#allocation5 + $0x3c] sm:$0xf]
        %v220 = vld [vmem:[%s2] sm:$0x1]
        %v222 = vlaneseq
        %v223 = vshrl.u32 %v222, 7
        %v224 = vsub.s32 0, %v223
        %v225 = vrot.slane %v220, %v224
        %v243 = vunpack.c.l.b16 %v204
        %v244 = vunpack.c.l.b16 %v205
        %v245 = vunpack.c.l.b16 %v206
        %v246 = vunpack.c.l.b16 %v207
        %v247 = vunpack.c.l.b16 %v208
        %v248 = vunpack.c.l.b16 %v209
        %v249 = vunpack.c.l.b16 %v210
        %v250 = vunpack.c.l.b16 %v211
        %v251 = vunpack.c.l.b16 %v212
        %v252 = vunpack.c.l.b16 %v213
        %v253 = vunpack.c.l.b16 %v214
        %v254 = vunpack.c.l.b16 %v215
        %v255 = vunpack.c.l.b16 %v216
        %v256 = vunpack.c.l.b16 %v217
        %v257 = vunpack.c.l.b16 %v218
        %v258 = vunpack.c.l.b16 %v219
        %v259 = vpack.c.b16 %v244, %v243
        %v260 = vpack.c.b16 %v246, %v245
        %v261 = vpack.c.b16 %v248, %v247
        %v262 = vpack.c.b16 %v250, %v249
        %v263 = vpack.c.b16 %v252, %v251
        %v264 = vpack.c.b16 %v254, %v253
        %v265 = vpack.c.b16 %v256, %v255
        %v266 = vpack.c.b16 %v258, %v257
        %275 = vmatprep.subr.bf16.mxu0 0
        %276 = vmatpush1.bf16.xpose.msra.mxu0 %v266
        %277 = vmatprep.subr.bf16.mxu0 0
        %278 = vmatpush1.bf16.xpose.msra.mxu0 %v265
        %279 = vmatprep.subr.bf16.mxu0 0
        %280 = vmatpush1.bf16.xpose.msra.mxu0 %v264
        %281 = vmatprep.subr.bf16.mxu0 0
        %282 = vmatpush1.bf16.xpose.msra.mxu0 %v263
        %283 = vmatprep.subr.bf16.mxu0 0
        %284 = vmatpush1.bf16.xpose.msra.mxu0 %v262
        %285 = vmatprep.subr.bf16.mxu0 0
        %286 = vmatpush1.bf16.xpose.msra.mxu0 %v261
        %287 = vmatprep.subr.bf16.mxu0 0
        %288 = vmatpush1.bf16.xpose.msra.mxu0 %v260
        %289 = vmatprep.subr.bf16.mxu0 0
        %290 = vmatpush1.bf16.xpose.msra.mxu0 %v259
        %291 = vmatprep.subr.bf16.mxu0 0
        %292 = vmatpush2.bf16.xpose.msra.mxu0 0
        %293 = vmatprep.subr.bf16.mxu0 0
        %294 = vmatpush2.bf16.xpose.msra.mxu0 0
        %295 = vmatprep.subr.bf16.mxu0 0
        %296 = vmatpush2.bf16.xpose.msra.mxu0 0
        %297 = vmatprep.subr.bf16.mxu0 0
        %298 = vmatpush2.bf16.xpose.msra.mxu0 0
        %299 = vmatprep.subr.bf16.mxu0 0
        %300 = vmatpush2.bf16.xpose.msra.mxu0 0
        %301 = vmatprep.subr.bf16.mxu0 0
        %302 = vmatpush2.bf16.xpose.msra.mxu0 0
        %303 = vmatprep.subr.bf16.mxu0 0
        %304 = vmatpush2.bf16.xpose.msra.mxu0 0
        %305 = vmatprep.subr.bf16.mxu0 0
        %306 = vmatpush2.bf16.xpose.msra.mxu0 0
        %307 = vmatprep.mubr.bf16.mxu0 0
        %308 = vmatmul.mubr.bf16.gmra.mxu0 %v203
        %v309 = vpop.f32.mrf.mxu0
        %v310 = vadd.f32 %v225, %v309
        %v311 = vpop.f32.mrf.mxu0
        %v312 = vpop.f32.mrf.mxu0
        %v313 = vpop.f32.mrf.mxu0
        %314 = vdwg.mxu0
        %315 = vmax.xlane.f32.xlu0 %v310
        %v316 = vpop.xlane.xlu0 %315
        %v317 = vsub.f32 %v310, %v316
        %v318 = vmul.f32 %v317, 1.442695
        %v319 = vpow.pop %v318
        %320 = vadd.xlane.f32.xlu0 %v319
        %v321 = vpop.xlane.xlu0 %320
        %v322 = vlog2.pop %v321
        %v323 = vmul.f32 %v322, 0.6931472
        %v324 = vsub.f32 %v317, %v323
        %325 = vst [vmem:[%s200] sm:$0xff] %v324
        %s326 = sand.u32 %s97, 1
        %s327 = scalar_lea.sflag [#allocation4], %s326
        %s328 = sand.u32 %s97, 1
        %s329 = smul.addr %s328, 8
        %s330 = scalar_lea.vmem [#allocation7], %s329
        // Predicated region
        $region41: #{tpu_custom_call.1} parent=31 // pred_check
          %p331 = pneg %p107
        $region42: #{tpu_custom_call.1} parent=31 // pred_check_branch
          %333 = sbr.rel (%p331) target = $region44
        $region43: #{tpu_custom_call.1} parent=31 // pred_region
          %s335 = ssub.s32 128, 128
          %336 = vsyncadd %s327, %s335
          %s337 = smul.addr %s21, 128
          %s338 = scalar_lea.hbm %s3, %s337
          %s340 = sshll.u32 %s330, 4
          %s341 = int_to_ptr.vmem [resolvable:$true] %s340
          %343 = dma.vmem_to_hbm [thread:$0]  %s341, 128, %s338, %s327
        $region44: #{tpu_custom_call.1} parent=31 // pred_fallthru
          _
      $region32: #{tpu_custom_call.1} parent=5 // pred_fallthru
        _
      %p344 = scmp.le.s32.totalorder 2, %s16
      // Predicated region
      $region45: #{tpu_custom_call.1} parent=5 // pred_check
        %p345 = pneg %p344
      $region46: #{tpu_custom_call.1} parent=5 // pred_check_branch
        %347 = sbr.rel (%p345) target = $region48
      $region47: #{tpu_custom_call.1} parent=5 // pred_region
        %s348 = ssub.s32 %s16, 2
        // Predicated region
        $region49: #{tpu_custom_call.1} parent=47 // pred_check
          %p349 = pneg %p113
        $region50: #{tpu_custom_call.1} parent=47 // pred_check_branch
          %351 = sbr.rel (%p349) target = $region52
        $region51: #{tpu_custom_call.1} parent=47 // pred_region
          %s352 = sand.u32 %s98, 1
          %s353 = scalar_lea.sflag [#allocation4], %s352
          %s354 = sand.u32 %s98, 1
          %s355 = smul.addr %s354, 8
          %s356 = scalar_lea.vmem [#allocation7], %s355
          %357 = dma.done %s353, 128
        $region52: #{tpu_custom_call.1} parent=47 // pred_fallthru
          _
      $region48: #{tpu_custom_call.1} parent=5 // pred_fallthru
        _
    $region6: #{tpu_custom_call.1} parent=1 // loop_footer
      %s20 = sadd.s32 1, %s16
    $region7: #{tpu_custom_call.1} parent=1 // loop_footer_branch
      %15 = sbr.rel target = $region3
    $region8: #{tpu_custom_call.1} parent=1 // loop_exit
      _
    %358 = vsyncpa [#allocation3], 1
    %s359 = scalar_lea.sflag [#allocation3], 1
    %360 = vsyncpa %s359, 1
    %361 = vsyncpa [#allocation6], 1
    %362 = vsyncpa [#allocation4], 1
    %s363 = scalar_lea.sflag [#allocation4], 1
    %364 = vsyncpa %s363, 1

</llo_original>
